<compile_context>
chip_gen: v5e
topology: v5e:2x2
jax: 0.10.0
libtpu: 0.0.40
codegen_flags: <defaults>
</compile_context>

<pallas_src>
import math

import jax
import jax.numpy as jnp
from jax.experimental import pallas as pl
from jax.experimental.pallas import tpu as pltpu

_SQRT_2_OVER_PI = math.sqrt(2.0 / math.pi)
_CUBIC_COEFF = 0.44715  # exactly as written in the PyTorch module


def _gelu_kernel(x_ref, o_ref):
    # x_ref / o_ref: (block_rows, D_pad) VMEM tiles.
    x = x_ref[...].astype(jnp.float32)
    x_sq = x * x
    # inner = sqrt(2/pi) * (x + c*x^3) == x * (a + (a*c)*x^2)   (factored)
    inner = x * (_SQRT_2_OVER_PI + (_SQRT_2_OVER_PI * _CUBIC_COEFF) * x_sq)
    half_x = 0.5 * x
    y = half_x + half_x * jnp.tanh(inner)      # tanh -> EUP, muls/adds -> VPU
    o_ref[...] = y.astype(o_ref.dtype)


def _round_up(a, b):
    return ((a + b - 1) // b) * b


def _sublane_multiple(dtype) -> int:
    # Rows per packed (sublane) tile: 8 for 4-byte, 16 for 2-byte, 32 for 1-byte.
    itemsize = jnp.dtype(dtype).itemsize
    if itemsize >= 4:
        return 8
    if itemsize == 2:
        return 16
    return 32


def gelu(x, *, target_block_bytes=4 * 1024 * 1024):
    """Elementwise GELU (tanh approx, coeff 0.44715) via a Pallas TPU kernel.

    Works for any shape: the last dim is the lane dimension, leading dims are
    flattened into rows; rows/lanes are zero-padded to (sublane,128)-aligned
    sizes (GELU(0)==0, and the padding is sliced off anyway).
    """
    orig_shape = x.shape
    dtype = x.dtype
    itemsize = jnp.dtype(dtype).itemsize

    D = orig_shape[-1] if x.ndim >= 1 else 1
    x2d = x.reshape(-1, D)
    N = x2d.shape[0]

    sub = _sublane_multiple(dtype)
    D_pad = _round_up(D, 128)
    N_pad = _round_up(max(N, 1), sub)

    # --- block sizing: by bytes, dtype-aware, VMEM-aware -------------------
    row_bytes = D_pad * itemsize
    bm = (target_block_bytes // row_bytes) // sub * sub
    bm = max(sub, min(bm, N_pad))

    # Ensure >=2 grid steps when there are enough rows (v7x megacore + keeps
    # the DMA/compute pipeline non-degenerate); neutral on v5e/v6e.
    if N_pad >= 2 * sub and -(-N_pad // bm) < 2:
        bm = max(sub, (N_pad // 2) // sub * sub)

    # Pad rows up to a multiple of bm so the grid divides evenly.
    N_final = _round_up(N_pad, bm)
    grid = (N_final // bm,)

    # --- pad input if needed -----------------------------------------------
    if (N_final != N) or (D_pad != D):
        x2d = jnp.pad(x2d, ((0, N_final - N), (0, D_pad - D)))

    n_elems = N_final * D_pad
    cost = pl.CostEstimate(
        flops=8 * n_elems,
        transcendentals=n_elems,
        bytes_accessed=2 * n_elems * itemsize,
    )

    out = pl.pallas_call(
        _gelu_kernel,
        out_shape=jax.ShapeDtypeStruct((N_final, D_pad), dtype),
        grid=grid,
        in_specs=[pl.BlockSpec((bm, D_pad), lambda i: (i, 0))],
        out_specs=pl.BlockSpec((bm, D_pad), lambda i: (i, 0)),
        compiler_params=pltpu.CompilerParams(
            dimension_semantics=("parallel",),
            vmem_limit_bytes=32 * 1024 * 1024,
        ),
        cost_estimate=cost,
    )(x2d)

    if (N_final != N) or (D_pad != D):
        out = out[:N, :D]
    return out.reshape(orig_shape)


def gelu_reference(x):
    """Pure-JAX reference matching the PyTorch forward exactly (in f32)."""
    xf = x.astype(jnp.float32)
    y = 0.5 * xf * (1.0 + jnp.tanh(
        _SQRT_2_OVER_PI * (xf + _CUBIC_COEFF * jnp.power(xf, 3))))
    return y.astype(x.dtype)


if __name__ == "__main__":
    # Shapes consistent with the module's example input: torch.rand(2, 4, 768)
    B, T, D = 2, 4, 768

    key = jax.random.PRNGKey(0)
    x = jax.random.uniform(key, (B, T, D), dtype=jnp.float32)

    out = jax.block_until_ready(gelu(x))
    ref = gelu_reference(x)

    assert out.shape == (B, T, D)
    assert jnp.allclose(out, ref, atol=1e-5, rtol=1e-5), "mismatch vs reference"

    print("KERNEL_OK")
</pallas_src>

<mosaic_0001>
module attributes {stable_mosaic.version = 11 : i64} {
  func.func @_gelu_kernel(%arg0: i32, %arg1: memref<8x768xf32, #tpu.memory_space<vmem>>, %arg2: memref<8x768xf32, #tpu.memory_space<vmem>>) attributes {dimension_semantics = [#tpu.dimension_semantics<parallel>], iteration_bounds = array<i64: 1>, scalar_prefetch = 0 : i64, scratch_operands = 0 : i64, tpu.core_type = #tpu.core_type<tc>, window_params = [{transform_indices = @transform_0, window_bounds = array<i64: 8, 768>}, {transform_indices = @transform_1, window_bounds = array<i64: 8, 768>}]} {
    %c0 = arith.constant 0 : index
    %c0_0 = arith.constant 0 : index
    %0 = vector.load %arg1[%c0, %c0_0] : memref<8x768xf32, #tpu.memory_space<vmem>>, vector<8x768xf32>
    %1 = arith.mulf %0, %0 : vector<8x768xf32>
    %cst = arith.constant 0.356774092 : f32
    %2 = vector.broadcast %cst : f32 to vector<8x768xf32>
    %3 = arith.mulf %2, %1 : vector<8x768xf32>
    %cst_1 = arith.constant 0.797884583 : f32
    %4 = vector.broadcast %cst_1 : f32 to vector<8x768xf32>
    %5 = arith.addf %4, %3 : vector<8x768xf32>
    %6 = arith.mulf %0, %5 : vector<8x768xf32>
    %cst_2 = arith.constant 5.000000e-01 : f32
    %7 = vector.broadcast %cst_2 : f32 to vector<8x768xf32>
    %8 = arith.mulf %7, %0 : vector<8x768xf32>
    %9 = math.tanh %6 : vector<8x768xf32>
    %10 = arith.mulf %8, %9 : vector<8x768xf32>
    %11 = arith.addf %8, %10 : vector<8x768xf32>
    %c0_3 = arith.constant 0 : index
    %c0_4 = arith.constant 0 : index
    %12 = vector.load %arg2[%c0_3, %c0_4] : memref<8x768xf32, #tpu.memory_space<vmem>>, vector<8x768xf32>
    tpu.vector_store %arg2[%c0_3, %c0_4], %11 {strides = array<i32>} : memref<8x768xf32, #tpu.memory_space<vmem>>, vector<8x768xf32>,
    return
  }
  func.func @transform_0(%arg0: i32) -> (i32, i32) {
    %c0_i32 = arith.constant 0 : i32
    %c0_i32_0 = arith.constant 0 : i32
    return %arg0, %c0_i32 : i32, i32
  }
  func.func @transform_1(%arg0: i32) -> (i32, i32) {
    %c0_i32 = arith.constant 0 : i32
    %c0_i32_0 = arith.constant 0 : i32
    return %arg0, %c0_i32 : i32, i32
  }
}

</mosaic_0001>

<llo_original>
// kernel: tpu_custom_call.1
$region0: #{tpu_custom_call.1}
  #allocation0 [shape = 'u32[]', space=smem, size = 0x4, offset = 0x4, fixed_abs, tag = 'smem constant byte address 0x4 - core index']
  #allocation1 [shape = 'u32[72,128]{1,0:T(1,128)}', space=vmem, size = 0x9000, scoped, tag = 'internal scratch']
  %s0 = inlined_call_operand.hbm [shape: f32[8,768], index: 0, kind: input, shape index: {}]
  %s1 = inlined_call_operand.hbm [shape: f32[8,768], index: 1, kind: output, shape index: {}]
  %s2 = sld [smem:[#allocation0]]
  $region18: #{tpu_custom_call.1} parent=0
    _
  %s4 = ssub.s32 1, %s2
  %s5 = scalar_select 0, %s4, %s2
  $region1: #{tpu_custom_call.1} parent=0
    #allocation2 [shape = 'u8[24576]{0}', space=vmem, size = 0x6000, scoped, tag = 'input window, operand 0, single buffered']
    #allocation3 [shape = 's32[1]{0}', space=sflag, size = 0x4, scoped, tag = 'scoped memory for tpu_custom_call.1']
    #allocation4 [shape = 's32[1]{0}', space=sflag, size = 0x4, scoped, tag = 'scoped memory for tpu_custom_call.1']
    #allocation5 [shape = 'u8[24576]{0}', space=vmem, size = 0x6000, scoped, tag = 'output window, operand 0, single buffered']
    %6 = vsyncpa [#allocation3], 0
    %7 = vsyncpa [#allocation4], 0
    // Predicated region
    $region2: #{tpu_custom_call.1} parent=1 // pred_check
      _
    $region3: #{tpu_custom_call.1} parent=1 // pred_check_branch
      %9 = sbr.rel (0) target = $region5
    $region4: #{tpu_custom_call.1} parent=1 // pred_region
      %11 = vsyncadd [#allocation3], 0
      %s13 = sshll.u32 %s0, 4
      %s14 = int_to_ptr.hbm [resolvable:$true] %s13
      %s15 = sshll.u32 [#allocation2], 4
      %s16 = int_to_ptr.vmem [resolvable:$true] %s15
      %18 = dma.hbm_to_vmem [thread:$0]  %s14, 768, %s16, [#allocation3]
    $region5: #{tpu_custom_call.1} parent=1 // pred_fallthru
      _
    // Predicated region
    $region6: #{tpu_custom_call.1} parent=1 // pred_check
      _
    $region7: #{tpu_custom_call.1} parent=1 // pred_check_branch
      %20 = sbr.rel (0) target = $region9
    $region8: #{tpu_custom_call.1} parent=1 // pred_region
      %22 = dma.done [#allocation3], 768
    $region9: #{tpu_custom_call.1} parent=1 // pred_fallthru
      _
    %v23 = vld [vmem:[#allocation2] sm:$0xff]
    %v24 = vld [vmem:[#allocation2 + $0x8] sm:$0xff]
    %v25 = vld [vmem:[#allocation2 + $0x10] sm:$0xff]
    %v26 = vld [vmem:[#allocation2 + $0x18] sm:$0xff]
    %v27 = vld [vmem:[#allocation2 + $0x20] sm:$0xff]
    %v28 = vld [vmem:[#allocation2 + $0x28] sm:$0xff]
    %v29 = vmul.f32 %v23, %v23
    %v30 = vmul.f32 %v24, %v24
    %v31 = vmul.f32 %v25, %v25
    %v32 = vmul.f32 %v26, %v26
    %v33 = vmul.f32 %v27, %v27
    %v34 = vmul.f32 %v28, %v28
    %v35 = vmul.f32 %v29, 0.3567741
    %v36 = vmul.f32 %v30, 0.3567741
    %v37 = vmul.f32 %v31, 0.3567741
    %v38 = vmul.f32 %v32, 0.3567741
    %v39 = vmul.f32 %v33, 0.3567741
    %v40 = vmul.f32 %v34, 0.3567741
    %v41 = vadd.f32 %v35, 0.7978846
    %v42 = vadd.f32 %v36, 0.7978846
    %v43 = vadd.f32 %v37, 0.7978846
    %v44 = vadd.f32 %v38, 0.7978846
    %v45 = vadd.f32 %v39, 0.7978846
    %v46 = vadd.f32 %v40, 0.7978846
    %v47 = vmul.f32 %v23, %v41
    %v48 = vmul.f32 %v24, %v42
    %v49 = vmul.f32 %v25, %v43
    %v50 = vmul.f32 %v26, %v44
    %v51 = vmul.f32 %v27, %v45
    %v52 = vmul.f32 %v28, %v46
    %v53 = vmul.f32 %v23, 0.5
    %v54 = vmul.f32 %v24, 0.5
    %v55 = vmul.f32 %v25, 0.5
    %v56 = vmul.f32 %v26, 0.5
    %v57 = vmul.f32 %v27, 0.5
    %v58 = vmul.f32 %v28, 0.5
    %v59 = vtanh.pop %v47
    %v60 = vtanh.pop %v48
    %v61 = vtanh.pop %v49
    %v62 = vtanh.pop %v50
    %v63 = vtanh.pop %v51
    %v64 = vtanh.pop %v52
    %v65 = vmul.f32 %v53, %v59
    %v66 = vmul.f32 %v54, %v60
    %v67 = vmul.f32 %v55, %v61
    %v68 = vmul.f32 %v56, %v62
    %v69 = vmul.f32 %v57, %v63
    %v70 = vmul.f32 %v58, %v64
    %v71 = vadd.f32 %v53, %v65
    %v72 = vadd.f32 %v54, %v66
    %v73 = vadd.f32 %v55, %v67
    %v74 = vadd.f32 %v56, %v68
    %v75 = vadd.f32 %v57, %v69
    %v76 = vadd.f32 %v58, %v70
    %77 = vst [vmem:[#allocation5] sm:$0xff] %v71
    %78 = vst [vmem:[#allocation5 + $0x8] sm:$0xff] %v72
    %79 = vst [vmem:[#allocation5 + $0x10] sm:$0xff] %v73
    %80 = vst [vmem:[#allocation5 + $0x18] sm:$0xff] %v74
    %81 = vst [vmem:[#allocation5 + $0x20] sm:$0xff] %v75
    %82 = vst [vmem:[#allocation5 + $0x28] sm:$0xff] %v76
    // Predicated region
    $region10: #{tpu_custom_call.1} parent=1 // pred_check
      _
    $region11: #{tpu_custom_call.1} parent=1 // pred_check_branch
      %84 = sbr.rel (0) target = $region13
    $region12: #{tpu_custom_call.1} parent=1 // pred_region
      %86 = vsyncadd [#allocation4], 0
      %s88 = sshll.u32 [#allocation5], 4
      %s89 = int_to_ptr.vmem [resolvable:$true] %s88
      %s90 = sshll.u32 %s1, 4
      %s91 = int_to_ptr.hbm [resolvable:$true] %s90
      %93 = dma.vmem_to_hbm [thread:$0]  %s89, 768, %s91, [#allocation4]
    $region13: #{tpu_custom_call.1} parent=1 // pred_fallthru
      _
    // Predicated region
    $region14: #{tpu_custom_call.1} parent=1 // pred_check
      _
    $region15: #{tpu_custom_call.1} parent=1 // pred_check_branch
      %95 = sbr.rel (0) target = $region17
    $region16: #{tpu_custom_call.1} parent=1 // pred_region
      %97 = dma.done [#allocation4], 768
    $region17: #{tpu_custom_call.1} parent=1 // pred_fallthru
      _
    %98 = vsyncpa [#allocation3], 1
    %99 = vsyncpa [#allocation4], 1

</llo_original>
